<compile_context>
chip_gen: v5e
topology: v5e:2x2
jax: 0.10.0
libtpu: 0.0.40
codegen_flags: <defaults>
</compile_context>

<pallas_src>
import functools

import jax
import jax.numpy as jnp
from jax import lax
from jax.experimental import pallas as pl
from jax.experimental.pallas import tpu as pltpu


# ---------------------------------------------------------------------------
# One-time probe: pltpu.roll shift convention (and multi-vreg availability).
# ---------------------------------------------------------------------------
@functools.lru_cache(maxsize=None)
def _roll_convention():
    """True  -> pltpu.roll(x, shift=1) moves data to higher lane indices,
       False -> it moves data to lower lane indices,
       None  -> roll could not be lowered; use the slice-shift fallback."""
    def probe(x_ref, o_ref):
        o_ref[...] = pltpu.roll(x_ref[...], shift=1, axis=1)
    try:
        # 256 lanes = 2 vregs wide: also validates multi-vreg lane rotation.
        x = jnp.broadcast_to(jnp.arange(256, dtype=jnp.float32), (8, 256))
        y = pl.pallas_call(
            probe, out_shape=jax.ShapeDtypeStruct((8, 256), jnp.float32))(x)
        y = jax.block_until_ready(y)
        return bool(y[0, 1] == 0.0)
    except Exception:   # lowering unavailable -> bulletproof fallback path
        return None


# ---------------------------------------------------------------------------
# Kernel
# ---------------------------------------------------------------------------
def _attention_kernel(x_ref, ml_ref, mr_ref, w1_ref, b1_ref, w2_ref, b2_ref,
                      w3_ref, b3_ref, out_ref, *, roll_to_higher):
    # x_ref : (F, N) bf16, N = BB * T_pad, time fastest within each batch row
    # ml/mr : (1, N) bf16 {0,1} periodic boundary masks for the t-1 / t+1 taps
    # wN    : fused-tap conv weights (bf16), bN / w3: f32 columns
    # out   : (1, N) f32 lane-dense sigmoid attention row
    N = x_ref.shape[-1]
    use_roll = roll_to_higher is not None
    if use_roll:
        shift_prev = 1 if roll_to_higher else N - 1      # builds v[:, t-1]
        shift_next = N - 1 if roll_to_higher else 1      # builds v[:, t+1]

    ml = ml_ref[...]      # zero t-1 tap at the start of every sequence
    mr = mr_ref[...]      # zero t+1 tap at / past the end of every sequence

    def tap_cat(v):
        # v: (C, N) bf16 -> (3C, N) bf16 = [v[:,t-1]; v[:,t]; v[:,t+1]] with
        # Conv1d(k=3, pad=1) zero padding at every per-sequence boundary
        # (periodic masks => the lane rolls never leak across batch rows).
        if use_roll:
            prev = pltpu.roll(v, shift=shift_prev, axis=1)
            nxt = pltpu.roll(v, shift=shift_next, axis=1)
        else:  # slice-shift fallback (no (T,T) shift matmuls, MXU stays free)
            zcol = jnp.zeros((v.shape[0], 1), v.dtype)
            prev = jnp.concatenate([zcol, v[:, : N - 1]], axis=1)
            nxt = jnp.concatenate([v[:, 1:], zcol], axis=1)
        return jnp.concatenate([prev * ml, v, nxt * mr], axis=0)

    x = x_ref[...]                                        # (F, N) bf16
    # Conv1d(dfeat->hdim, k=3, pad=1): one fused K=3F bf16 matmul, f32 acc.
    h1 = jnp.dot(w1_ref[...], tap_cat(x),
                 preferred_element_type=jnp.float32) + b1_ref[...]
    h1 = jnp.maximum(h1, 0.2 * h1)                        # LeakyReLU(0.2)
    # TODO(synk): Dropout(0.7) implemented as identity (eval-mode semantics).
    # Conv1d(hdim->hdim, k=3, pad=1): one fused K=3H bf16 matmul, f32 acc.
    h2 = jnp.dot(w2_ref[...], tap_cat(h1.astype(x.dtype)),
                 preferred_element_type=jnp.float32) + b2_ref[...]
    h2 = jnp.maximum(h2, 0.2 * h2)                        # LeakyReLU(0.2)
    # Conv1d(hdim->1, k=1) + Sigmoid: VPU multiply + sublane reduction
    # (an M=1 matmul would push a nearly empty tile through the MXU).
    logit = jnp.sum(w3_ref[...] * h2, axis=0, keepdims=True) + b3_ref[...]
    out_ref[...] = jax.nn.sigmoid(logit)


# ---------------------------------------------------------------------------
# Host-side wrappers
# ---------------------------------------------------------------------------
def _round_up(a, m):
    return ((a + m - 1) // m) * m


def _pick_block_batch(B, F, T_pad, *, max_x_block_bytes=512 * 1024,
                      min_grid_steps=2):
    """Largest batch block that (a) keeps the bf16 x block under the VMEM
    budget and (b) leaves >= min_grid_steps grid steps so v7x's two
    TensorCores both get work (harmless on single-TC v5e / v6e)."""
    per_batch = F * T_pad * 2                     # bf16 bytes per batch row
    bb_vmem = max(1, max_x_block_bytes // per_batch)
    bb_split = max(1, pl.cdiv(B, min_grid_steps))
    return int(max(1, min(B, bb_vmem, bb_split)))


def prepare_params(W1, b1, W2, b2, W3, b3, compute_dtype=jnp.bfloat16):
    """PyTorch Conv1d weights -> fused-tap ("im2col") kernel layout.
    W1: (H, F, 3), W2: (H, H, 3), W3: (1, H, 1); biases are 1-D.
    Fused column k*C_in + c pairs with tap k (t-1, t, t+1), channel c."""
    H, F_, K = W1.shape
    w1c = jnp.transpose(W1, (0, 2, 1)).reshape(H, K * F_).astype(compute_dtype)
    w2c = jnp.transpose(W2, (0, 2, 1)).reshape(H, K * H).astype(compute_dtype)
    w3c = W3[0, :, 0][:, None].astype(jnp.float32)              # (H, 1)
    return (w1c, b1[:, None].astype(jnp.float32),
            w2c, b2[:, None].astype(jnp.float32),
            w3c, b3[:, None].astype(jnp.float32))               # b3: (1, 1)


def attention_forward(x, params, *, compute_dtype=jnp.bfloat16):
    """x: (B, dfeat, T) float32 (PyTorch NCL layout). Returns (B, 1, T) f32."""
    B, F_, T = x.shape
    w1c, b1c, w2c, b2c, w3c, b3c = params
    H = w1c.shape[0]

    T_pad = _round_up(T, 128)                    # lane-align the time axis
    BB = _pick_block_batch(B, F_, T_pad)
    B_pad = _round_up(B, BB)
    n_blocks = B_pad // BB
    N_blk = BB * T_pad
    N_all = B_pad * T_pad

    # One-time relayout (single XLA pass): (B, F, T) f32 -> (F, B_pad*T_pad)
    # bf16 with time fastest, so every grid block IS the fused matmul RHS.
    xc = x.astype(compute_dtype)
    if B_pad != B or T_pad != T:
        xc = jnp.pad(xc, ((0, B_pad - B), (0, 0), (0, T_pad - T)))
    xc = jnp.transpose(xc, (1, 0, 2)).reshape(F_, N_all)

    # Periodic Conv1d(k=3, pad=1) boundary masks (period T_pad, valid length
    # T), precomputed once so in-kernel rolls never leak across batch rows or
    # into the zero-padded time tail.
    t_idx = jnp.arange(N_all, dtype=jnp.int32) % T_pad
    mask_l = (t_idx > 0).astype(compute_dtype)[None, :]          # (1, N_all)
    mask_r = (t_idx < T - 1).astype(compute_dtype)[None, :]      # (1, N_all)

    kernel = functools.partial(_attention_kernel,
                               roll_to_higher=_roll_convention())

    out = pl.pallas_call(
        kernel,
        out_shape=jax.ShapeDtypeStruct((1, N_all), jnp.float32),
        grid_spec=pltpu.PrefetchScalarGridSpec(
            num_scalar_prefetch=0,
            grid=(n_blocks,),
            in_specs=[
                pl.BlockSpec((F_, N_blk), lambda i: (0, i)),     # x (fused)
                pl.BlockSpec((1, N_blk), lambda i: (0, i)),      # left mask
                pl.BlockSpec((1, N_blk), lambda i: (0, i)),      # right mask
                pl.BlockSpec((H, 3 * F_), lambda i: (0, 0)),     # W1 fused
                pl.BlockSpec((H, 1), lambda i: (0, 0)),          # b1
                pl.BlockSpec((H, 3 * H), lambda i: (0, 0)),      # W2 fused
                pl.BlockSpec((H, 1), lambda i: (0, 0)),          # b2
                pl.BlockSpec((H, 1), lambda i: (0, 0)),          # W3 column
                pl.BlockSpec((1, 1), lambda i: (0, 0)),          # b3
            ],
            out_specs=pl.BlockSpec((1, N_blk), lambda i: (0, i)),
        ),
        compiler_params=pltpu.CompilerParams(
            dimension_semantics=("parallel",)),
    )(xc, mask_l, mask_r, w1c, b1c, w2c, b2c, w3c, b3c)

    return out.reshape(B_pad, T_pad)[:B, :T][:, None, :]


# ----------------------------- pure-JAX reference -----------------------------
def _conv1d_ref(x, w, b, pad):
    y = lax.conv_general_dilated(
        x, w, window_strides=(1,), padding=[(pad, pad)],
        dimension_numbers=("NCH", "OIH", "NCH"),
        precision=lax.Precision.HIGHEST)
    return y + b[None, :, None]


def attention_ref(x, torch_params):
    W1, b1, W2, b2, W3, b3 = torch_params
    h = _conv1d_ref(x, W1, b1, pad=1)
    h = jnp.where(h > 0, h, 0.2 * h)
    h = _conv1d_ref(h, W2, b2, pad=1)
    h = jnp.where(h > 0, h, 0.2 * h)
    h = _conv1d_ref(h, W3, b3, pad=0)
    return jax.nn.sigmoid(h)


if __name__ == "__main__":
    def run_case(key, B, DFEAT, T):
        HDIM = DFEAT // 2
        kx, k1, k2, k3, k4, k5, k6 = jax.random.split(key, 7)
        # Deterministic synthetic parameters (PyTorch Conv1d weight shapes).
        W1 = 0.1 * jax.random.normal(k1, (HDIM, DFEAT, 3), jnp.float32)
        b1 = 0.05 * jax.random.normal(k2, (HDIM,), jnp.float32)
        W2 = 0.1 * jax.random.normal(k3, (HDIM, HDIM, 3), jnp.float32)
        b2 = 0.05 * jax.random.normal(k4, (HDIM,), jnp.float32)
        W3 = 0.1 * jax.random.normal(k5, (1, HDIM, 1), jnp.float32)
        b3 = 0.05 * jax.random.normal(k6, (1,), jnp.float32)
        x = jax.random.normal(kx, (B, DFEAT, T), jnp.float32)

        params = prepare_params(W1, b1, W2, b2, W3, b3)
        out = jax.block_until_ready(attention_forward(x, params))
        ref = attention_ref(x, (W1, b1, W2, b2, W3, b3))
        assert out.shape == (B, 1, T), out.shape
        err = float(jnp.max(jnp.abs(out - ref)))
        assert jnp.allclose(out, ref, rtol=1e-2, atol=1e-2), err
        return err

    key = jax.random.PRNGKey(0)
    k_main, k_small = jax.random.split(key)
    # Multi-block grid (BB=3 -> 2 "parallel" grid steps), T lane-aligned.
    run_case(k_main, B=6, DFEAT=32, T=128)
    # Batch/time padding path: odd T (96 -> padded to 128), BB=1, 2 steps.
    run_case(k_small, B=2, DFEAT=16, T=96)

    print("KERNEL_OK")
</pallas_src>

<mosaic_0001>
module attributes {stable_mosaic.version = 11 : i64} {
  func.func @probe(%arg0: memref<8x256xf32, #tpu.memory_space<vmem>>, %arg1: memref<8x256xf32, #tpu.memory_space<vmem>>) attributes {dimension_semantics = [], scalar_prefetch = 0 : i64, scratch_operands = 0 : i64, tpu.core_type = #tpu.core_type<tc>} {
    %c0 = arith.constant 0 : index
    %c0_0 = arith.constant 0 : index
    %0 = vector.load %arg0[%c0, %c0_0] : memref<8x256xf32, #tpu.memory_space<vmem>>, vector<8x256xf32>
    %c1_i32 = arith.constant 1 : i32
    %1 = tpu.dynamic_rotate %0 by %c1_i32 dim 1 : vector<8x256xf32>, i32 -> vector<8x256xf32>
    %c0_1 = arith.constant 0 : index
    %c0_2 = arith.constant 0 : index
    %2 = vector.load %arg1[%c0_1, %c0_2] : memref<8x256xf32, #tpu.memory_space<vmem>>, vector<8x256xf32>
    tpu.vector_store %arg1[%c0_1, %c0_2], %1 {strides = array<i32>} : memref<8x256xf32, #tpu.memory_space<vmem>>, vector<8x256xf32>,
    return
  }
}

module attributes {stable_mosaic.version = 11 : i64} {
  func.func @_attention_kernel(%arg0: i32, %arg1: memref<32x384xbf16, #tpu.memory_space<vmem>>, %arg2: memref<1x384xbf16, #tpu.memory_space<vmem>>, %arg3: memref<1x384xbf16, #tpu.memory_space<vmem>>, %arg4: memref<16x96xbf16, #tpu.memory_space<vmem>>, %arg5: memref<16x1xf32, #tpu.memory_space<vmem>>, %arg6: memref<16x48xbf16, #tpu.memory_space<vmem>>, %arg7: memref<16x1xf32, #tpu.memory_space<vmem>>, %arg8: memref<16x1xf32, #tpu.memory_space<vmem>>, %arg9: memref<1x1xf32, #tpu.memory_space<vmem>>, %arg10: memref<1x384xf32, #tpu.memory_space<vmem>>) attributes {dimension_semantics = [#tpu.dimension_semantics<parallel>], iteration_bounds = array<i64: 2>, scalar_prefetch = 0 : i64, scratch_operands = 0 : i64, tpu.core_type = #tpu.core_type<tc>, window_params = [{transform_indices = @transform_0, window_bounds = array<i64: 32, 384>}, {transform_indices = @transform_1, window_bounds = array<i64: 1, 384>}, {transform_indices = @transform_2, window_bounds = array<i64: 1, 384>}, {pipeline_mode = #tpu.pipeline_mode<synchronous>, transform_indices = @transform_3, window_bounds = array<i64: 16, 96>}, {pipeline_mode = #tpu.pipeline_mode<synchronous>, transform_indices = @transform_4, window_bounds = array<i64: 16, 1>}, {pipeline_mode = #tpu.pipeline_mode<synchronous>, transform_indices = @transform_5, window_bounds = array<i64: 16, 48>}, {pipeline_mode = #tpu.pipeline_mode<synchronous>, transform_indices = @transform_6, window_bounds = array<i64: 16, 1>}, {pipeline_mode = #tpu.pipeline_mode<synchronous>, transform_indices = @transform_7, window_bounds = array<i64: 16, 1>}, {pipeline_mode = #tpu.pipeline_mode<synchronous>, transform_indices = @transform_8, window_bounds = array<i64: 1, 1>}, {transform_indices = @transform_9, window_bounds = array<i64: 1, 384>}]} {
    %c0 = arith.constant 0 : index
    %c0_0 = arith.constant 0 : index
    %0 = vector.load %arg2[%c0, %c0_0] : memref<1x384xbf16, #tpu.memory_space<vmem>>, vector<1x384xbf16>
    %c0_1 = arith.constant 0 : index
    %c0_2 = arith.constant 0 : index
    %1 = vector.load %arg3[%c0_1, %c0_2] : memref<1x384xbf16, #tpu.memory_space<vmem>>, vector<1x384xbf16>
    %c0_3 = arith.constant 0 : index
    %c0_4 = arith.constant 0 : index
    %2 = vector.load %arg1[%c0_3, %c0_4] : memref<32x384xbf16, #tpu.memory_space<vmem>>, vector<32x384xbf16>
    %c0_5 = arith.constant 0 : index
    %c0_6 = arith.constant 0 : index
    %3 = vector.load %arg4[%c0_5, %c0_6] : memref<16x96xbf16, #tpu.memory_space<vmem>>, vector<16x96xbf16>
    %cst = arith.constant 0.000000e+00 : bf16
    %4 = vector.broadcast %cst : bf16 to vector<32x1xbf16>
    %5 = vector.extract_strided_slice %2 {offsets = [0, 0], sizes = [32, 383], strides = [1, 1]} : vector<32x384xbf16> to vector<32x383xbf16>
    %6 = tpu.concatenate %4, %5 in 1 : vector<32x1xbf16>, vector<32x383xbf16> -> vector<32x384xbf16>
    %7 = vector.extract_strided_slice %2 {offsets = [0, 1], sizes = [32, 383], strides = [1, 1]} : vector<32x384xbf16> to vector<32x383xbf16>
    %8 = tpu.concatenate %7, %4 in 1 : vector<32x383xbf16>, vector<32x1xbf16> -> vector<32x384xbf16>
    %9 = vector.broadcast %0 : vector<1x384xbf16> to vector<32x384xbf16>
    %10 = arith.mulf %6, %9 : vector<32x384xbf16>
    %11 = vector.broadcast %1 : vector<1x384xbf16> to vector<32x384xbf16>
    %12 = arith.mulf %8, %11 : vector<32x384xbf16>
    %13 = tpu.concatenate %10, %2, %12 in 0 : vector<32x384xbf16>, vector<32x384xbf16>, vector<32x384xbf16> -> vector<96x384xbf16>
    %cst_7 = arith.constant dense<0.000000e+00> : vector<16x384xf32>
    %14 = tpu.matmul %3, %13, %cst_7 {dimension_numbers = #tpu.dot_dimension_numbers<[1], [0], [0], [1], [0, 0, 1, 1], [], []>} : vector<16x96xbf16>, vector<96x384xbf16>, vector<16x384xf32> -> vector<16x384xf32>
    %c0_8 = arith.constant 0 : index
    %c0_9 = arith.constant 0 : index
    %15 = vector.load %arg5[%c0_8, %c0_9] : memref<16x1xf32, #tpu.memory_space<vmem>>, vector<16x1xf32>
    %16 = vector.broadcast %15 : vector<16x1xf32> to vector<16x384xf32>
    %17 = arith.addf %14, %16 : vector<16x384xf32>
    %cst_10 = arith.constant 2.000000e-01 : f32
    %18 = vector.broadcast %cst_10 : f32 to vector<16x384xf32>
    %19 = arith.mulf %18, %17 : vector<16x384xf32>
    %20 = arith.maximumf %17, %19 : vector<16x384xf32>
    %c0_11 = arith.constant 0 : index
    %c0_12 = arith.constant 0 : index
    %21 = vector.load %arg6[%c0_11, %c0_12] : memref<16x48xbf16, #tpu.memory_space<vmem>>, vector<16x48xbf16>
    %22 = arith.truncf %20 : vector<16x384xf32> to vector<16x384xbf16>
    %cst_13 = arith.constant 0.000000e+00 : bf16
    %23 = vector.broadcast %cst_13 : bf16 to vector<16x1xbf16>
    %24 = vector.extract_strided_slice %22 {offsets = [0, 0], sizes = [16, 383], strides = [1, 1]} : vector<16x384xbf16> to vector<16x383xbf16>
    %25 = tpu.concatenate %23, %24 in 1 : vector<16x1xbf16>, vector<16x383xbf16> -> vector<16x384xbf16>
    %26 = vector.extract_strided_slice %22 {offsets = [0, 1], sizes = [16, 383], strides = [1, 1]} : vector<16x384xbf16> to vector<16x383xbf16>
    %27 = tpu.concatenate %26, %23 in 1 : vector<16x383xbf16>, vector<16x1xbf16> -> vector<16x384xbf16>
    %28 = vector.broadcast %0 : vector<1x384xbf16> to vector<16x384xbf16>
    %29 = arith.mulf %25, %28 : vector<16x384xbf16>
    %30 = vector.broadcast %1 : vector<1x384xbf16> to vector<16x384xbf16>
    %31 = arith.mulf %27, %30 : vector<16x384xbf16>
    %32 = tpu.concatenate %29, %22, %31 in 0 : vector<16x384xbf16>, vector<16x384xbf16>, vector<16x384xbf16> -> vector<48x384xbf16>
    %cst_14 = arith.constant dense<0.000000e+00> : vector<16x384xf32>
    %33 = tpu.matmul %21, %32, %cst_14 {dimension_numbers = #tpu.dot_dimension_numbers<[1], [0], [0], [1], [0, 0, 1, 1], [], []>} : vector<16x48xbf16>, vector<48x384xbf16>, vector<16x384xf32> -> vector<16x384xf32>
    %c0_15 = arith.constant 0 : index
    %c0_16 = arith.constant 0 : index
    %34 = vector.load %arg7[%c0_15, %c0_16] : memref<16x1xf32, #tpu.memory_space<vmem>>, vector<16x1xf32>
    %35 = vector.broadcast %34 : vector<16x1xf32> to vector<16x384xf32>
    %36 = arith.addf %33, %35 : vector<16x384xf32>
    %cst_17 = arith.constant 2.000000e-01 : f32
    %37 = vector.broadcast %cst_17 : f32 to vector<16x384xf32>
    %38 = arith.mulf %37, %36 : vector<16x384xf32>
    %39 = arith.maximumf %36, %38 : vector<16x384xf32>
    %c0_18 = arith.constant 0 : index
    %c0_19 = arith.constant 0 : index
    %40 = vector.load %arg8[%c0_18, %c0_19] : memref<16x1xf32, #tpu.memory_space<vmem>>, vector<16x1xf32>
    %41 = vector.broadcast %40 : vector<16x1xf32> to vector<16x384xf32>
    %42 = arith.mulf %41, %39 : vector<16x384xf32>
    %cst_20 = arith.constant dense<0.000000e+00> : vector<384xf32>
    %43 = vector.multi_reduction <add>, %42, %cst_20 [0] : vector<16x384xf32> to vector<384xf32>
    %44 = vector.shape_cast %43 : vector<384xf32> to vector<1x384xf32>
    %c0_21 = arith.constant 0 : index
    %c0_22 = arith.constant 0 : index
    %45 = vector.load %arg9[%c0_21, %c0_22] : memref<1x1xf32, #tpu.memory_space<vmem>>, vector<1x1xf32>
    %46 = vector.broadcast %45 : vector<1x1xf32> to vector<1x384xf32>
    %47 = arith.addf %44, %46 : vector<1x384xf32>
    %48 = arith.negf %47 : vector<1x384xf32>
    %49 = math.exp %48 : vector<1x384xf32>
    %cst_23 = arith.constant 1.000000e+00 : f32
    %50 = vector.broadcast %cst_23 : f32 to vector<1x384xf32>
    %51 = arith.addf %50, %49 : vector<1x384xf32>
    %52 = arith.divf %50, %51 : vector<1x384xf32>
    %c0_24 = arith.constant 0 : index
    %c0_25 = arith.constant 0 : index
    %53 = vector.load %arg10[%c0_24, %c0_25] : memref<1x384xf32, #tpu.memory_space<vmem>>, vector<1x384xf32>
    tpu.vector_store %arg10[%c0_24, %c0_25], %52 {strides = array<i32>} : memref<1x384xf32, #tpu.memory_space<vmem>>, vector<1x384xf32>,
    return
  }
  func.func @transform_0(%arg0: i32) -> (i32, i32) {
    %c0_i32 = arith.constant 0 : i32
    %c0_i32_0 = arith.constant 0 : i32
    return %c0_i32, %arg0 : i32, i32
  }
  func.func @transform_1(%arg0: i32) -> (i32, i32) {
    %c0_i32 = arith.constant 0 : i32
    %c0_i32_0 = arith.constant 0 : i32
    return %c0_i32, %arg0 : i32, i32
  }
  func.func @transform_2(%arg0: i32) -> (i32, i32) {
    %c0_i32 = arith.constant 0 : i32
    %c0_i32_0 = arith.constant 0 : i32
    return %c0_i32, %arg0 : i32, i32
  }
  func.func @transform_3(%arg0: i32) -> (i32, i32) {
    %c0_i32 = arith.constant 0 : i32
    %c0_i32_0 = arith.constant 0 : i32
    %c0_i32_1 = arith.constant 0 : i32
    return %c0_i32, %c0_i32_0 : i32, i32
  }
  func.func @transform_4(%arg0: i32) -> (i32, i32) {
    %c0_i32 = arith.constant 0 : i32
    %c0_i32_0 = arith.constant 0 : i32
    %c0_i32_1 = arith.constant 0 : i32
    return %c0_i32, %c0_i32_0 : i32, i32
  }
  func.func @transform_5(%arg0: i32) -> (i32, i32) {
    %c0_i32 = arith.constant 0 : i32
    %c0_i32_0 = arith.constant 0 : i32
    %c0_i32_1 = arith.constant 0 : i32
    return %c0_i32, %c0_i32_0 : i32, i32
  }
  func.func @transform_6(%arg0: i32) -> (i32, i32) {
    %c0_i32 = arith.constant 0 : i32
    %c0_i32_0 = arith.constant 0 : i32
    %c0_i32_1 = arith.constant 0 : i32
    return %c0_i32, %c0_i32_0 : i32, i32
  }
  func.func @transform_7(%arg0: i32) -> (i32, i32) {
    %c0_i32 = arith.constant 0 : i32
    %c0_i32_0 = arith.constant 0 : i32
    %c0_i32_1 = arith.constant 0 : i32
    return %c0_i32, %c0_i32_0 : i32, i32
  }
  func.func @transform_8(%arg0: i32) -> (i32, i32) {
    %c0_i32 = arith.constant 0 : i32
    %c0_i32_0 = arith.constant 0 : i32
    %c0_i32_1 = arith.constant 0 : i32
    return %c0_i32, %c0_i32_0 : i32, i32
  }
  func.func @transform_9(%arg0: i32) -> (i32, i32) {
    %c0_i32 = arith.constant 0 : i32
    %c0_i32_0 = arith.constant 0 : i32
    return %c0_i32, %arg0 : i32, i32
  }
}

</mosaic_0001>

<llo_original>
// kernel: tpu_custom_call.1
$region0: #{tpu_custom_call.1}
  #allocation0 [shape = 'u32[]', space=smem, size = 0x4, offset = 0x4, fixed_abs, tag = 'smem constant byte address 0x4 - core index']
  #allocation1 [shape = 'u32[72,128]{1,0:T(1,128)}', space=vmem, size = 0x9000, scoped, tag = 'internal scratch']
  %s0 = inlined_call_operand.hbm [shape: f32[8,256], index: 0, kind: input, shape index: {}]
  %s1 = inlined_call_operand.hbm [shape: f32[8,256], index: 1, kind: output, shape index: {}]
  %s2 = sld [smem:[#allocation0]]
  $region18: #{tpu_custom_call.1} parent=0
    _
  %s4 = ssub.s32 1, %s2
  %s5 = scalar_select 0, %s4, %s2
  $region1: #{tpu_custom_call.1} parent=0
    #allocation2 [shape = 'u8[8192]{0}', space=vmem, size = 0x2000, scoped, tag = 'input window, operand 0, single buffered']
    #allocation3 [shape = 's32[1]{0}', space=sflag, size = 0x4, scoped, tag = 'scoped memory for tpu_custom_call.1']
    #allocation4 [shape = 's32[1]{0}', space=sflag, size = 0x4, scoped, tag = 'scoped memory for tpu_custom_call.1']
    #allocation5 [shape = 'u8[8192]{0}', space=vmem, size = 0x2000, scoped, tag = 'output window, operand 0, single buffered']
    %6 = vsyncpa [#allocation3], 0
    %7 = vsyncpa [#allocation4], 0
    // Predicated region
    $region2: #{tpu_custom_call.1} parent=1 // pred_check
      _
    $region3: #{tpu_custom_call.1} parent=1 // pred_check_branch
      %9 = sbr.rel (0) target = $region5
    $region4: #{tpu_custom_call.1} parent=1 // pred_region
      %11 = vsyncadd [#allocation3], 0
      %s13 = sshll.u32 %s0, 4
      %s14 = int_to_ptr.hbm [resolvable:$true] %s13
      %s15 = sshll.u32 [#allocation2], 4
      %s16 = int_to_ptr.vmem [resolvable:$true] %s15
      %18 = dma.hbm_to_vmem [thread:$0]  %s14, 256, %s16, [#allocation3]
    $region5: #{tpu_custom_call.1} parent=1 // pred_fallthru
      _
    // Predicated region
    $region6: #{tpu_custom_call.1} parent=1 // pred_check
      _
    $region7: #{tpu_custom_call.1} parent=1 // pred_check_branch
      %20 = sbr.rel (0) target = $region9
    $region8: #{tpu_custom_call.1} parent=1 // pred_region
      %22 = dma.done [#allocation3], 256
    $region9: #{tpu_custom_call.1} parent=1 // pred_fallthru
      _
    %v23 = vld [vmem:[#allocation2] sm:$0xff]
    %v24 = vld [vmem:[#allocation2 + $0x8] sm:$0xff]
    %25 = vrot.lane.b32.xlu0 %v23, 1
    %v26 = vpop.permute.xlu0 %25
    %27 = vrot.lane.b32.xlu0 %v24, 1
    %v28 = vpop.permute.xlu0 %27
    %v29 = vlaneseq
    %v30 = vand.u32 %v29, 127
    %vm31 = vcmp.lt.s32.totalorder %v30, 1
    %v32 = vsel %vm31, %v26, %v28
    %v33 = vsel %vm31, %v28, %v26
    %34 = vst [vmem:[#allocation5] sm:$0xff] %v33
    %35 = vst [vmem:[#allocation5 + $0x8] sm:$0xff] %v32
    // Predicated region
    $region10: #{tpu_custom_call.1} parent=1 // pred_check
      _
    $region11: #{tpu_custom_call.1} parent=1 // pred_check_branch
      %37 = sbr.rel (0) target = $region13
    $region12: #{tpu_custom_call.1} parent=1 // pred_region
      %39 = vsyncadd [#allocation4], 0
      %s41 = sshll.u32 [#allocation5], 4
      %s42 = int_to_ptr.vmem [resolvable:$true] %s41
      %s43 = sshll.u32 %s1, 4
      %s44 = int_to_ptr.hbm [resolvable:$true] %s43
      %46 = dma.vmem_to_hbm [thread:$0]  %s42, 256, %s44, [#allocation4]
    $region13: #{tpu_custom_call.1} parent=1 // pred_fallthru
      _
    // Predicated region
    $region14: #{tpu_custom_call.1} parent=1 // pred_check
      _
    $region15: #{tpu_custom_call.1} parent=1 // pred_check_branch
      %48 = sbr.rel (0) target = $region17
    $region16: #{tpu_custom_call.1} parent=1 // pred_region
      %50 = dma.done [#allocation4], 256
    $region17: #{tpu_custom_call.1} parent=1 // pred_fallthru
      _
    %51 = vsyncpa [#allocation3], 1
    %52 = vsyncpa [#allocation4], 1

// kernel: tpu_custom_call.1
$region0: #{tpu_custom_call.1}
  #allocation0 [shape = 'u32[]', space=smem, size = 0x4, offset = 0x4, fixed_abs, tag = 'smem constant byte address 0x4 - core index']
  #allocation1 [shape = 'u32[72,128]{1,0:T(1,128)}', space=vmem, size = 0x9000, scoped, tag = 'internal scratch']
  #allocation2 [shape = 'f32[1,1]{1,0:T(1,128)S(1)}', space=vmem, size = 0x200, scoped, tag = 'scoped memory for tpu_custom_call.1']
  %s0 = inlined_call_operand.hbm [shape: bf16[32,768], index: 0, kind: input, shape index: {}]
  %s1 = inlined_call_operand.vmem [shape: bf16[1,768], index: 1, kind: input, shape index: {}]
  %s2 = inlined_call_operand.vmem [shape: bf16[1,768], index: 2, kind: input, shape index: {}]
  %s3 = inlined_call_operand.vmem [shape: bf16[16,96], index: 3, kind: input, shape index: {}]
  %s4 = inlined_call_operand.vmem [shape: f32[16,1], index: 4, kind: input, shape index: {}]
  %s5 = inlined_call_operand.vmem [shape: bf16[16,48], index: 5, kind: input, shape index: {}]
  %s6 = inlined_call_operand.vmem [shape: f32[16,1], index: 6, kind: input, shape index: {}]
  %s7 = inlined_call_operand.vmem [shape: f32[16,1], index: 7, kind: input, shape index: {}]
  %s8 = inlined_call_operand.<no memory space> [shape: f32[1,1], index: 8, kind: input, shape index: {}]
  %s9 = inlined_call_operand.hbm [shape: f32[1,768], index: 9, kind: output, shape index: {}]
  %s10 = sld [smem:[#allocation0]]
  $region73: #{tpu_custom_call.1} parent=0
    _
  %s12 = ssub.s32 1, %s10
  %s13 = scalar_select 0, %s12, %s10
  %v14 = vstv %s8
  %15 = vst [vmem:[#allocation2] sm:$0x1] %v14
  $region1: #{tpu_custom_call.1} parent=0
    #allocation3 [shape = 'u8[49152]{0}', space=vmem, size = 0xc000, scoped, tag = 'input window, operand 0']
    #allocation4 [shape = 's32[2]{0}', space=sflag, size = 0x8, scoped, tag = 'scoped memory for tpu_custom_call.1']
    #allocation5 [shape = 's32[2]{0}', space=sflag, size = 0x8, scoped, tag = 'scoped memory for tpu_custom_call.1']
    #allocation6 [shape = 'u8[3072]{0}', space=vmem, size = 0xc00, scoped, tag = 'output window, operand 0']
    %16 = vsyncpa [#allocation4], 0
    %s17 = scalar_lea.sflag [#allocation4], 1
    %18 = vsyncpa %s17, 0
    %19 = vsyncpa [#allocation5], 0
    %s20 = scalar_lea.sflag [#allocation5], 1
    %21 = vsyncpa %s20, 0
    loop: start=0, step=1, limit=4
    $region2: #{tpu_custom_call.1} parent=1 // loop_pre_header
      _
    $region3: #{tpu_custom_call.1} parent=1 // loop_header
      %s23 = sphi 0, %s27
      %p24 = scmp.ge.s32.totalorder %s23, 4
      %s33 = sphi 0, %s35
      %s36 = sphi 0, %s33
      %s37 = sphi 0, %s36
      %s53 = sphi 0, %s37
      %s59 = sphi 0, %s61
      %s62 = sphi 0, %s59
      %s63 = sphi 0, %s62
      %s79 = sphi 0, %s63
      %s85 = sphi 0, %s87
      %s88 = sphi 0, %s85
      %s89 = sphi 0, %s88
      %s105 = sphi 0, %s89
      %s109 = sphi 0, %s109
      %s111 = sphi 0, %s109
      %s112 = sphi 0, %s111
      %s126 = sphi 0, %s112
      %s130 = sphi 0, %s130
      %s132 = sphi 0, %s130
      %s133 = sphi 0, %s132
      %s147 = sphi 0, %s133
      %s151 = sphi 0, %s151
      %s153 = sphi 0, %s151
      %s154 = sphi 0, %s153
      %s168 = sphi 0, %s154
      %s172 = sphi 0, %s172
      %s174 = sphi 0, %s172
      %s175 = sphi 0, %s174
      %s189 = sphi 0, %s175
      %s193 = sphi 0, %s193
      %s195 = sphi 0, %s193
      %s196 = sphi 0, %s195
      %s210 = sphi 0, %s196
      %s214 = sphi 0, %s214
      %s216 = sphi 0, %s214
      %s217 = sphi 0, %s216
      %s231 = sphi 0, %s217
      %s237 = sphi 0, %s239
      %s240 = sphi 0, %s237
      %s241 = sphi 0, %s240
      %s257 = sphi 0, %s241
    $region4: #{tpu_custom_call.1} parent=1 // loop_header_branch
      %26 = sbr.rel (%p24) target = $region8
    $region5: #{tpu_custom_call.1} parent=1 // loop_body
      %s28 = ssub.s32 %s23, 1
      %s29 = ssub.s32 %s23, 2
      %s30 = sadd.s32 %s23, 1
      %s31 = ssub.s32 %s23, %s30
      %p32 = scmp.eq.s32.totalorder %s31, 0
      %s34 = sadd.s32 %s33, 1
      %s35 = scalar_select %p32, %s33, %s34
      %p38 = pneg %p32
      %p39 = scmp.eq.s32.totalorder %s23, 1
      %p40 = por %p38, %p39
      %p41 = scmp.ne.s32.totalorder %s33, %s36
      %p42 = scmp.eq.s32.totalorder %s23, 0
      %p43 = por %p41, %p42
      %p44 = scmp.ne.s32.totalorder %s33, %s36
      %p45 = scmp.eq.s32.totalorder %s28, 1
      %p46 = por %p44, %p45
      %p47 = scmp.ne.s32.totalorder %s36, %s37
      %p48 = scmp.eq.s32.totalorder %s28, 0
      %p49 = por %p47, %p48
      %p50 = scmp.ne.s32.totalorder %s36, %s37
      %p51 = scmp.eq.s32.totalorder %s29, 1
      %p52 = por %p50, %p51
      %p54 = scmp.ne.s32.totalorder %s37, %s53
      %p55 = scmp.eq.s32.totalorder %s29, 0
      %p56 = por %p54, %p55
      %s57 = ssub.s32 %s23, %s30
      %p58 = scmp.eq.s32.totalorder %s57, 0
      %s60 = sadd.s32 %s59, 1
      %s61 = scalar_select %p58, %s59, %s60
      %p64 = pneg %p58
      %p65 = scmp.eq.s32.totalorder %s23, 1
      %p66 = por %p64, %p65
      %p67 = scmp.ne.s32.totalorder %s59, %s62
      %p68 = scmp.eq.s32.totalorder %s23, 0
      %p69 = por %p67, %p68
      %p70 = scmp.ne.s32.totalorder %s59, %s62
      %p71 = scmp.eq.s32.totalorder %s28, 1
      %p72 = por %p70, %p71
      %p73 = scmp.ne.s32.totalorder %s62, %s63
      %p74 = scmp.eq.s32.totalorder %s28, 0
      %p75 = por %p73, %p74
      %p76 = scmp.ne.s32.totalorder %s62, %s63
      %p77 = scmp.eq.s32.totalorder %s29, 1
      %p78 = por %p76, %p77
      %p80 = scmp.ne.s32.totalorder %s63, %s79
      %p81 = scmp.eq.s32.totalorder %s29, 0
      %p82 = por %p80, %p81
      %s83 = ssub.s32 %s23, %s30
      %p84 = scmp.eq.s32.totalorder %s83, 0
      %s86 = sadd.s32 %s85, 1
      %s87 = scalar_select %p84, %s85, %s86
      %p90 = pneg %p84
      %p91 = scmp.eq.s32.totalorder %s23, 1
      %p92 = por %p90, %p91
      %p93 = scmp.ne.s32.totalorder %s85, %s88
      %p94 = scmp.eq.s32.totalorder %s23, 0
      %p95 = por %p93, %p94
      %p96 = scmp.ne.s32.totalorder %s85, %s88
      %p97 = scmp.eq.s32.totalorder %s28, 1
      %p98 = por %p96, %p97
      %p99 = scmp.ne.s32.totalorder %s88, %s89
      %p100 = scmp.eq.s32.totalorder %s28, 0
      %p101 = por %p99, %p100
      %p102 = scmp.ne.s32.totalorder %s88, %s89
      %p103 = scmp.eq.s32.totalorder %s29, 1
      %p104 = por %p102, %p103
      %p106 = scmp.ne.s32.totalorder %s89, %s105
      %p107 = scmp.eq.s32.totalorder %s29, 0
      %p108 = por %p106, %p107
      %s110 = sadd.s32 %s109, 1
      %p113 = scmp.eq.s32.totalorder %s23, 1
      %p114 = scmp.ne.s32.totalorder %s109, %s111
      %p115 = scmp.eq.s32.totalorder %s23, 0
      %p116 = por %p114, %p115
      %p117 = scmp.ne.s32.totalorder %s109, %s111
      %p118 = scmp.eq.s32.totalorder %s28, 1
      %p119 = por %p117, %p118
      %p120 = scmp.ne.s32.totalorder %s111, %s112
      %p121 = scmp.eq.s32.totalorder %s28, 0
      %p122 = por %p120, %p121
      %p123 = scmp.ne.s32.totalorder %s111, %s112
      %p124 = scmp.eq.s32.totalorder %s29, 1
      %p125 = por %p123, %p124
      %p127 = scmp.ne.s32.totalorder %s112, %s126
      %p128 = scmp.eq.s32.totalorder %s29, 0
      %p129 = por %p127, %p128
      %s131 = sadd.s32 %s130, 1
      %p134 = scmp.eq.s32.totalorder %s23, 1
      %p135 = scmp.ne.s32.totalorder %s130, %s132
      %p136 = scmp.eq.s32.totalorder %s23, 0
      %p137 = por %p135, %p136
      %p138 = scmp.ne.s32.totalorder %s130, %s132
      %p139 = scmp.eq.s32.totalorder %s28, 1
      %p140 = por %p138, %p139
      %p141 = scmp.ne.s32.totalorder %s132, %s133
      %p142 = scmp.eq.s32.totalorder %s28, 0
      %p143 = por %p141, %p142
      %p144 = scmp.ne.s32.totalorder %s132, %s133
      %p145 = scmp.eq.s32.totalorder %s29, 1
      %p146 = por %p144, %p145
      %p148 = scmp.ne.s32.totalorder %s133, %s147
      %p149 = scmp.eq.s32.totalorder %s29, 0
      %p150 = por %p148, %p149
      %s152 = sadd.s32 %s151, 1
      %p155 = scmp.eq.s32.totalorder %s23, 1
      %p156 = scmp.ne.s32.totalorder %s151, %s153
      %p157 = scmp.eq.s32.totalorder %s23, 0
      %p158 = por %p156, %p157
      %p159 = scmp.ne.s32.totalorder %s151, %s153
      %p160 = scmp.eq.s32.totalorder %s28, 1
      %p161 = por %p159, %p160
      %p162 = scmp.ne.s32.totalorder %s153, %s154
      %p163 = scmp.eq.s32.totalorder %s28, 0
      %p164 = por %p162, %p163
      %p165 = scmp.ne.s32.totalorder %s153, %s154
      %p166 = scmp.eq.s32.totalorder %s29, 1
      %p167 = por %p165, %p166
      %p169 = scmp.ne.s32.totalorder %s154, %s168
      %p170 = scmp.eq.s32.totalorder %s29, 0
      %p171 = por %p169, %p170
      %s173 = sadd.s32 %s172, 1
      %p176 = scmp.eq.s32.totalorder %s23, 1
      %p177 = scmp.ne.s32.totalorder %s172, %s174
      %p178 = scmp.eq.s32.totalorder %s23, 0
      %p179 = por %p177, %p178
      %p180 = scmp.ne.s32.totalorder %s172, %s174
      %p181 = scmp.eq.s32.totalorder %s28, 1
      %p182 = por %p180, %p181
      %p183 = scmp.ne.s32.totalorder %s174, %s175
      %p184 = scmp.eq.s32.totalorder %s28, 0
      %p185 = por %p183, %p184
      %p186 = scmp.ne.s32.totalorder %s174, %s175
      %p187 = scmp.eq.s32.totalorder %s29, 1
      %p188 = por %p186, %p187
      %p190 = scmp.ne.s32.totalorder %s175, %s189
      %p191 = scmp.eq.s32.totalorder %s29, 0
      %p192 = por %p190, %p191
      %s194 = sadd.s32 %s193, 1
      %p197 = scmp.eq.s32.totalorder %s23, 1
      %p198 = scmp.ne.s32.totalorder %s193, %s195
      %p199 = scmp.eq.s32.totalorder %s23, 0
      %p200 = por %p198, %p199
      %p201 = scmp.ne.s32.totalorder %s193, %s195
      %p202 = scmp.eq.s32.totalorder %s28, 1
      %p203 = por %p201, %p202
      %p204 = scmp.ne.s32.totalorder %s195, %s196
      %p205 = scmp.eq.s32.totalorder %s28, 0
      %p206 = por %p204, %p205
      %p207 = scmp.ne.s32.totalorder %s195, %s196
      %p208 = scmp.eq.s32.totalorder %s29, 1
      %p209 = por %p207, %p208
      %p211 = scmp.ne.s32.totalorder %s196, %s210
      %p212 = scmp.eq.s32.totalorder %s29, 0
      %p213 = por %p211, %p212
      %s215 = sadd.s32 %s214, 1
      %p218 = scmp.eq.s32.totalorder %s23, 1
      %p219 = scmp.ne.s32.totalorder %s214, %s216
      %p220 = scmp.eq.s32.totalorder %s23, 0
      %p221 = por %p219, %p220
      %p222 = scmp.ne.s32.totalorder %s214, %s216
      %p223 = scmp.eq.s32.totalorder %s28, 1
      %p224 = por %p222, %p223
      %p225 = scmp.ne.s32.totalorder %s216, %s217
      %p226 = scmp.eq.s32.totalorder %s28, 0
      %p227 = por %p225, %p226
      %p228 = scmp.ne.s32.totalorder %s216, %s217
      %p229 = scmp.eq.s32.totalorder %s29, 1
      %p230 = por %p228, %p229
      %p232 = scmp.ne.s32.totalorder %s217, %s231
      %p233 = scmp.eq.s32.totalorder %s29, 0
      %p234 = por %p232, %p233
      %s235 = ssub.s32 %s23, %s30
      %p236 = scmp.eq.s32.totalorder %s235, 0
      %s238 = sadd.s32 %s237, 1
      %s239 = scalar_select %p236, %s237, %s238
      %p242 = pneg %p236
      %p243 = scmp.eq.s32.totalorder %s23, 1
      %p244 = por %p242, %p243
      %p245 = scmp.ne.s32.totalorder %s237, %s240
      %p246 = scmp.eq.s32.totalorder %s23, 0
      %p247 = por %p245, %p246
      %p248 = scmp.ne.s32.totalorder %s237, %s240
      %p249 = scmp.eq.s32.totalorder %s28, 1
      %p250 = por %p248, %p249
      %p251 = scmp.ne.s32.totalorder %s240, %s241
      %p252 = scmp.eq.s32.totalorder %s28, 0
      %p253 = por %p251, %p252
      %p254 = scmp.ne.s32.totalorder %s240, %s241
      %p255 = scmp.eq.s32.totalorder %s29, 1
      %p256 = por %p254, %p255
      %p258 = scmp.ne.s32.totalorder %s241, %s257
      %p259 = scmp.eq.s32.totalorder %s29, 0
      %p260 = por %p258, %p259
      %p261 = scmp.le.s32.totalorder 1, %s23
      %p262 = scmp.lt.s32.totalorder %s23, 3
      %p263 = pnand %p261, %p262
      %p264 = pneg %p263
      // Predicated region
      $region9: #{tpu_custom_call.1} parent=5 // pred_check
        _
      $region10: #{tpu_custom_call.1} parent=5 // pred_check_branch
        %266 = sbr.rel (%p263) target = $region12
      $region11: #{tpu_custom_call.1} parent=5 // pred_region
        %s267 = ssub.s32 %s23, 1
        // Predicated region
        $region13: #{tpu_custom_call.1} parent=11 // pred_check
          %p268 = pneg %p122
        $region14: #{tpu_custom_call.1} parent=11 // pred_check_branch
          %270 = sbr.rel (%p268) target = $region16
        $region15: #{tpu_custom_call.1} parent=11 // pred_region
          _
        $region16: #{tpu_custom_call.1} parent=11 // pred_fallthru
          _
        // Predicated region
        $region17: #{tpu_custom_call.1} parent=11 // pred_check
          %p271 = pneg %p143
        $region18: #{tpu_custom_call.1} parent=11 // pred_check_branch
          %273 = sbr.rel (%p271) target = $region20
        $region19: #{tpu_custom_call.1} parent=11 // pred_region
          _
        $region20: #{tpu_custom_call.1} parent=11 // pred_fallthru
          _
        // Predicated region
        $region21: #{tpu_custom_call.1} parent=11 // pred_check
          %p274 = pneg %p164
        $region22: #{tpu_custom_call.1} parent=11 // pred_check_branch
          %276 = sbr.rel (%p274) target = $region24
        $region23: #{tpu_custom_call.1} parent=11 // pred_region
          _
        $region24: #{tpu_custom_call.1} parent=11 // pred_fallthru
          _
        // Predicated region
        $region25: #{tpu_custom_call.1} parent=11 // pred_check
          %p277 = pneg %p185
        $region26: #{tpu_custom_call.1} parent=11 // pred_check_branch
          %279 = sbr.rel (%p277) target = $region28
        $region27: #{tpu_custom_call.1} parent=11 // pred_region
          _
        $region28: #{tpu_custom_call.1} parent=11 // pred_fallthru
          _
        // Predicated region
        $region29: #{tpu_custom_call.1} parent=11 // pred_check
          %p280 = pneg %p206
        $region30: #{tpu_custom_call.1} parent=11 // pred_check_branch
          %282 = sbr.rel (%p280) target = $region32
        $region31: #{tpu_custom_call.1} parent=11 // pred_region
          _
        $region32: #{tpu_custom_call.1} parent=11 // pred_fallthru
          _
        // Predicated region
        $region33: #{tpu_custom_call.1} parent=11 // pred_check
          %p283 = pneg %p227
        $region34: #{tpu_custom_call.1} parent=11 // pred_check_branch
          %285 = sbr.rel (%p283) target = $region36
        $region35: #{tpu_custom_call.1} parent=11 // pred_region
          _
        $region36: #{tpu_custom_call.1} parent=11 // pred_fallthru
          _
      $region12: #{tpu_custom_call.1} parent=5 // pred_fallthru
        _
      %p286 = scmp.lt.s32.totalorder %s23, 2
      // Predicated region
      $region37: #{tpu_custom_call.1} parent=5 // pred_check
        %p287 = pneg %p286
      $region38: #{tpu_custom_call.1} parent=5 // pred_check_branch
        %289 = sbr.rel (%p287) target = $region40
      $region39: #{tpu_custom_call.1} parent=5 // pred_region
        // Predicated region
        $region41: #{tpu_custom_call.1} parent=39 // pred_check
          %p290 = pneg %p43
        $region42: #{tpu_custom_call.1} parent=39 // pred_check_branch
          %292 = sbr.rel (%p290) target = $region44
        $region43: #{tpu_custom_call.1} parent=39 // pred_region
          %s293 = sand.u32 %s33, 1
          %s294 = scalar_lea.sflag [#allocation4], %s293
          %s295 = sand.u32 %s33, 1
          %s296 = smul.addr %s295, 48
          %s297 = scalar_lea.vmem [#allocation3], %s296
          %s298 = smul.u32 3, %s23
          %300 = vsyncadd %s294, 0
          %s301 = smul.addr %s298, 4
          %s302 = scalar_lea.hbm %s0, %s301
          %s303 = sshll.u32 %s302, 4
          %s304 = int_to_ptr.hbm [resolvable:$true] %s303
          %s305 = sshll.u32 %s297, 4
          %s306 = int_to_ptr.vmem [resolvable:$true] %s305
          %311 = dma.hbm_to_vmem [thread:$0]  %s304, 768, %s306, %s294, 384, 192, 12
        $region44: #{tpu_custom_call.1} parent=39 // pred_fallthru
          _
        // Predicated region
        $region45: #{tpu_custom_call.1} parent=39 // pred_check
          %p312 = pneg %p69
        $region46: #{tpu_custom_call.1} parent=39 // pred_check_branch
          %314 = sbr.rel (%p312) target = $region48
        $region47: #{tpu_custom_call.1} parent=39 // pred_region
          %s315 = smul.u32 3, %s23
          %p316 = scmp.lt.s32.totalorder %s315, 5
          %s317 = scalar_select %p316, %s315, 5
          %s318 = scalar_lea.vmem %s1, %s317
          %s319 = smul.u32 3, %s23
        $region48: #{tpu_custom_call.1} parent=39 // pred_fallthru
          _
        // Predicated region
        $region49: #{tpu_custom_call.1} parent=39 // pred_check
          %p320 = pneg %p95
        $region50: #{tpu_custom_call.1} parent=39 // pred_check_branch
          %322 = sbr.rel (%p320) target = $region52
        $region51: #{tpu_custom_call.1} parent=39 // pred_region
          %s323 = smul.u32 3, %s23
          %p324 = scmp.lt.s32.totalorder %s323, 5
          %s325 = scalar_select %p324, %s323, 5
          %s326 = scalar_lea.vmem %s2, %s325
          %s327 = smul.u32 3, %s23
        $region52: #{tpu_custom_call.1} parent=39 // pred_fallthru
          _
      $region40: #{tpu_custom_call.1} parent=5 // pred_fallthru
        _
      %p328 = scmp.le.s32.totalorder 1, %s23
      %p329 = scmp.lt.s32.totalorder %s23, 3
      %p330 = pnand %p328, %p329
      %p331 = pneg %p330
      // Predicated region
      $region53: #{tpu_custom_call.1} parent=5 // pred_check
        _
      $region54: #{tpu_custom_call.1} parent=5 // pred_check_branch
        %333 = sbr.rel (%p330) target = $region56
      $region55: #{tpu_custom_call.1} parent=5 // pred_region
        %s334 = ssub.s32 %s23, 1
        %s335 = sand.u32 %s36, 1
        %s336 = scalar_lea.sflag [#allocation4], %s335
        %s337 = sand.u32 %s36, 1
        %s338 = smul.addr %s337, 48
        %s339 = scalar_lea.vmem [#allocation3], %s338
        // Predicated region
        $region57: #{tpu_custom_call.1} parent=55 // pred_check
          %p340 = pneg %p49
        $region58: #{tpu_custom_call.1} parent=55 // pred_check_branch
          %342 = sbr.rel (%p340) target = $region60
        $region59: #{tpu_custom_call.1} parent=55 // pred_region
          %344 = dma.done %s336, 768
        $region60: #{tpu_custom_call.1} parent=55 // pred_fallthru
          _
        %s345 = sand.u32 %s36, 1
        %s346 = scalar_lea.sflag [#allocation4], %s345
        %s347 = sand.u32 %s36, 1
        %s348 = smul.addr %s347, 48
        %s349 = scalar_lea.vmem [#allocation3], %s348
        %p350 = pneg %p49
        %p351 = pneg %p46
        %s352 = smul.u32 3, %s28
        %p353 = scmp.lt.s32.totalorder %s352, 5
        %s354 = scalar_select %p353, %s352, 5
        %s355 = scalar_lea.vmem %s1, %s354
        %p356 = pneg %p75
        %p357 = pneg %p72
        %s358 = smul.u32 3, %s28
        %p359 = scmp.lt.s32.totalorder %s358, 5
        %s360 = scalar_select %p359, %s358, 5
        %s361 = scalar_lea.vmem %s2, %s360
        %p362 = pneg %p101
        %p363 = pneg %p98
        %p364 = pneg %p122
        %p365 = pneg %p119
        %p366 = pneg %p143
        %p367 = pneg %p140
        %p368 = pneg %p164
        %p369 = pneg %p161
        %p370 = pneg %p185
        %p371 = pneg %p182
        %p372 = pneg %p206
        %p373 = pneg %p203
        %p374 = pneg %p227
        %p375 = pneg %p224
        %p376 = pneg %p253
        %p377 = pneg %p250
        %s378 = sand.u32 %s240, 1
        %s379 = scalar_lea.sflag [#allocation5], %s378
        %s380 = sand.u32 %s240, 1
        %s381 = smul.addr %s380, 3
        %s382 = scalar_lea.vmem [#allocation6], %s381
        %s383 = smul.u32 3, %s28
        %s384 = smul.u32 3, %s28
        %p385 = scmp.lt.s32.totalorder %s384, 5
        %s386 = scalar_select %p385, %s384, 5
        %s387 = scalar_lea.vmem %s1, %s386
        %s388 = smul.u32 3, %s28
        %s389 = smul.u32 3, %s28
        %p390 = scmp.lt.s32.totalorder %s389, 5
        %s391 = scalar_select %p390, %s389, 5
        %s392 = scalar_lea.vmem %s2, %s391
        %s393 = smul.u32 3, %s28
        %s394 = smul.u32 3, %s28
        %v396 = vld [vmem:[%s387] sm:$0x7]
        %v397 = vld [vmem:[%s392] sm:$0x7]
        %v398 = vld [vmem:[%s339] sm:$0xff]
        %v399 = vld [vmem:[%s339 + $0x8] sm:$0xf]
        %v400 = vld [vmem:[%s339 + $0xc] sm:$0xff]
        %v401 = vld [vmem:[%s339 + $0x14] sm:$0xf]
        %v402 = vld [vmem:[%s339 + $0x18] sm:$0xff]
        %v403 = vld [vmem:[%s339 + $0x20] sm:$0xf]
        %v404 = vld [vmem:[%s339 + $0x24] sm:$0xff]
        %v405 = vld [vmem:[%s339 + $0x2c] sm:$0xf]
        %v406 = vld [vmem:[%s3] sm:$0xf]
        %v407 = vld [vmem:[%s3 + $0x4] sm:$0xf]
        %v416 = vunpack.c.l.b16 %v398
        %v417 = vunpack.c.h.b16 %v398
        %v418 = vunpack.c.l.b16 %v399
        %v419 = vunpack.c.l.b16 %v400
        %v420 = vunpack.c.h.b16 %v400
        %v421 = vunpack.c.l.b16 %v401
        %v422 = vunpack.c.l.b16 %v402
        %v423 = vunpack.c.h.b16 %v402
        %v424 = vunpack.c.l.b16 %v403
        %v425 = vunpack.c.l.b16 %v404
        %v426 = vunpack.c.h.b16 %v404
        %v427 = vunpack.c.l.b16 %v405
        %v428 = vpack.c.b16 %v419, %v416
        %v429 = vpack.c.b16 %v420, %v417
        %v430 = vpack.c.b16 %v421, %v418
        %v431 = vpack.c.b16 %v425, %v422
        %v432 = vpack.c.b16 %v426, %v423
        %v433 = vpack.c.b16 %v427, %v424
        %434 = vrot.lane.b32.xlu0 %v428, 1
        %v435 = vpop.permute.xlu0 %434
        %436 = vrot.lane.b32.xlu0 %v429, 1
        %v437 = vpop.permute.xlu0 %436
        %438 = vrot.lane.b32.xlu0 %v430, 1
        %v439 = vpop.permute.xlu0 %438
        %440 = vrot.lane.b32.xlu0 %v431, 1
        %v441 = vpop.permute.xlu0 %440
        %442 = vrot.lane.b32.xlu0 %v432, 1
        %v443 = vpop.permute.xlu0 %442
        %444 = vrot.lane.b32.xlu0 %v433, 1
        %v445 = vpop.permute.xlu0 %444
        %vm446 = vcmask 7168
        %v447 = vsel %vm446, %v435, %v437
        %v448 = vsel %vm446, %v437, %v439
        %v449 = vsel %vm446, %v441, %v443
        %v450 = vsel %vm446, %v443, %v445
        %vm455 = vcmask 7168
        %v458 = vsel %vm455, 0, %v435
        %v461 = vsel %vm455, 0, %v441
        %463 = vrot.lane.b32.xlu0 %v428, 127
        %v464 = vpop.permute.xlu0 %463
        %465 = vrot.lane.b32.xlu0 %v429, 127
        %v466 = vpop.permute.xlu0 %465
        %467 = vrot.lane.b32.xlu0 %v430, 127
        %v468 = vpop.permute.xlu0 %467
        %469 = vrot.lane.b32.xlu0 %v431, 127
        %v470 = vpop.permute.xlu0 %469
        %471 = vrot.lane.b32.xlu0 %v432, 127
        %v472 = vpop.permute.xlu0 %471
        %473 = vrot.lane.b32.xlu0 %v433, 127
        %v474 = vpop.permute.xlu0 %473
        %vm475 = vcmask 1039360
        %v476 = vsel %vm475, %v464, %v466
        %v477 = vsel %vm475, %v466, %v468
        %v478 = vsel %vm475, %v470, %v472
        %v479 = vsel %vm475, %v472, %v474
        %vm484 = vcmask 1039360
        %v486 = vsel %vm484, %v468, 0
        %v489 = vsel %vm484, %v474, 0
        %492 = vst [vmem:[#allocation1] ss:$9 sm:$0xff] %v396
        %v493 = vld [vmem:[#allocation1] sm:$0xff]
        %v494 = vld [vmem:[#allocation1 + $0x9] sm:$0xff]
        %v495 = vld [vmem:[#allocation1 + $0x12] sm:$0xff]
        %v496 = vpack.i.b16 %v493, %v493
        %v498 = vperm.slane %v496, 0
        %v499 = vpack.i.b16 %v494, %v494
        %v501 = vperm.slane %v499, 0
        %v502 = vpack.i.b16 %v495, %v495
        %v504 = vperm.slane %v502, 0
        %v505 = vunpack.c.l.bf16 %v458
        %v506 = vunpack.c.l.bf16 %v447
        %v507 = vunpack.c.l.bf16 %v448
        %v508 = vunpack.c.h.bf16 %v458
        %v509 = vunpack.c.h.bf16 %v447
        %v510 = vunpack.c.h.bf16 %v448
        %v511 = vunpack.c.l.bf16 %v461
        %v512 = vunpack.c.l.bf16 %v449
        %v513 = vunpack.c.l.bf16 %v450
        %v514 = vunpack.c.h.bf16 %v461
        %v515 = vunpack.c.h.bf16 %v449
        %v516 = vunpack.c.h.bf16 %v450
        %v517 = vunpack.c.l.bf16 %v498
        %v518 = vunpack.c.l.bf16 %v501
        %v519 = vunpack.c.l.bf16 %v504
        %v520 = vmul.f32 %v505, %v517
        %v521 = vmul.f32 %v506, %v518
        %v522 = vmul.f32 %v507, %v519
        %v523 = vmul.f32 %v508, %v517
        %v524 = vmul.f32 %v509, %v518
        %v525 = vmul.f32 %v510, %v519
        %v526 = vmul.f32 %v511, %v517
        %v527 = vmul.f32 %v512, %v518
        %v528 = vmul.f32 %v513, %v519
        %v529 = vmul.f32 %v514, %v517
        %v530 = vmul.f32 %v515, %v518
        %v531 = vmul.f32 %v516, %v519
        %v532 = vpack.c.bf16 %v521, %v520
        %v533 = vpack.c.bf16 %v522, %v522
        %v534 = vpack.c.bf16 %v524, %v523
        %v535 = vpack.c.bf16 %v525, %v525
        %v536 = vpack.c.bf16 %v527, %v526
        %v537 = vpack.c.bf16 %v528, %v528
        %v538 = vpack.c.bf16 %v530, %v529
        %v539 = vpack.c.bf16 %v531, %v531
        %541 = vst [vmem:[#allocation1] ss:$9 sm:$0xff] %v397
        %v542 = vld [vmem:[#allocation1] sm:$0xff]
        %v543 = vld [vmem:[#allocation1 + $0x9] sm:$0xff]
        %v544 = vld [vmem:[#allocation1 + $0x12] sm:$0xff]
        %v545 = vpack.i.b16 %v542, %v542
        %v547 = vperm.slane %v545, 0
        %v548 = vpack.i.b16 %v543, %v543
        %v550 = vperm.slane %v548, 0
        %v551 = vpack.i.b16 %v544, %v544
        %v553 = vperm.slane %v551, 0
        %v554 = vunpack.c.l.bf16 %v476
        %v555 = vunpack.c.l.bf16 %v477
        %v556 = vunpack.c.l.bf16 %v486
        %v557 = vunpack.c.h.bf16 %v476
        %v558 = vunpack.c.h.bf16 %v477
        %v559 = vunpack.c.h.bf16 %v486
        %v560 = vunpack.c.l.bf16 %v478
        %v561 = vunpack.c.l.bf16 %v479
        %v562 = vunpack.c.l.bf16 %v489
        %v563 = vunpack.c.h.bf16 %v478
        %v564 = vunpack.c.h.bf16 %v479
        %v565 = vunpack.c.h.bf16 %v489
        %v566 = vunpack.c.l.bf16 %v547
        %v567 = vunpack.c.l.bf16 %v550
        %v568 = vunpack.c.l.bf16 %v553
        %v569 = vmul.f32 %v554, %v566
        %v570 = vmul.f32 %v555, %v567
        %v571 = vmul.f32 %v556, %v568
        %v572 = vmul.f32 %v557, %v566
        %v573 = vmul.f32 %v558, %v567
        %v574 = vmul.f32 %v559, %v568
        %v575 = vmul.f32 %v560, %v566
        %v576 = vmul.f32 %v561, %v567
        %v577 = vmul.f32 %v562, %v568
        %v578 = vmul.f32 %v563, %v566
        %v579 = vmul.f32 %v564, %v567
        %v580 = vmul.f32 %v565, %v568
        %v581 = vpack.c.bf16 %v570, %v569
        %v582 = vpack.c.bf16 %v571, %v571
        %v583 = vpack.c.bf16 %v573, %v572
        %v584 = vpack.c.bf16 %v574, %v574
        %v585 = vpack.c.bf16 %v576, %v575
        %v586 = vpack.c.bf16 %v577, %v577
        %v587 = vpack.c.bf16 %v579, %v578
        %v588 = vpack.c.bf16 %v580, %v580
        %v597 = vunpack.c.l.b16 %v532
        %v598 = vunpack.c.h.b16 %v532
        %v599 = vunpack.c.l.b16 %v533
        %v600 = vunpack.c.l.b16 %v534
        %v601 = vunpack.c.h.b16 %v534
        %v602 = vunpack.c.l.b16 %v535
        %v603 = vunpack.c.l.b16 %v536
        %v604 = vunpack.c.h.b16 %v536
        %v605 = vunpack.c.l.b16 %v537
        %v606 = vunpack.c.l.b16 %v538
        %v607 = vunpack.c.h.b16 %v538
        %v608 = vunpack.c.l.b16 %v539
        %v609 = vpack.c.b16 %v600, %v597
        %v610 = vpack.c.b16 %v601, %v598
        %v611 = vpack.c.b16 %v602, %v599
        %v612 = vpack.c.b16 %v606, %v603
        %v613 = vpack.c.b16 %v607, %v604
        %v614 = vpack.c.b16 %v608, %v605
        %v635 = vunpack.c.l.b16 %v581
        %v636 = vunpack.c.h.b16 %v581
        %v637 = vunpack.c.l.b16 %v582
        %v638 = vunpack.c.l.b16 %v583
        %v639 = vunpack.c.h.b16 %v583
        %v640 = vunpack.c.l.b16 %v584
        %v641 = vunpack.c.l.b16 %v585
        %v642 = vunpack.c.h.b16 %v585
        %v643 = vunpack.c.l.b16 %v586
        %v644 = vunpack.c.l.b16 %v587
        %v645 = vunpack.c.h.b16 %v587
        %v646 = vunpack.c.l.b16 %v588
        %v647 = vpack.c.b16 %v638, %v635
        %v648 = vpack.c.b16 %v639, %v636
        %v649 = vpack.c.b16 %v640, %v637
        %v650 = vpack.c.b16 %v644, %v641
        %v651 = vpack.c.b16 %v645, %v642
        %v652 = vpack.c.b16 %v646, %v643
        %v659 = vld [vmem:[%s4] sm:$0xff]
        %v660 = vld [vmem:[%s4 + $0x8] sm:$0xff]
        %662 = vset.pattern.permute.xlu0 0
        %663 = vperm.xlu0 %662, %v659
        %v664 = vpop.permute.xlu0 %663
        %667 = vset.pattern.permute.xlu0 0
        %668 = vperm.xlu0 %667, %v660
        %v669 = vpop.permute.xlu0 %668
        %v673 = vunpack.c.l.b16 %v406
        %v674 = vunpack.c.l.b16 %v407
        %v675 = vpack.c.b16 %v674, %v673
        %vm676 = vcmask 785408
        %v678 = vsel %vm676, %v675, 0
        %680 = vmatpush.bf16.msra.mxu0 0
        %681 = vmatpush.bf16.msra.mxu0 0
        %682 = vmatpush.bf16.msra.mxu0 %v650
        %683 = vmatpush.bf16.msra.mxu0 %v647
        %684 = vmatpush.bf16.msra.mxu0 %v431
        %685 = vmatpush.bf16.msra.mxu0 %v428
        %686 = vmatpush.bf16.msra.mxu0 %v612
        %687 = vmatpush.bf16.msra.mxu0 %v609
        %688 = vmatmul.bf16.gmra.mxu0 %v678
        %v689 = vpop.f32.mrf.mxu0
        %v690 = vadd.f32 %v664, %v689
        %v691 = vpop.f32.mrf.mxu0
        %v692 = vadd.f32 %v669, %v691
        %693 = vdwg.mxu0
        %694 = vmatpush.bf16.msra.mxu0 0
        %695 = vmatpush.bf16.msra.mxu0 0
        %696 = vmatpush.bf16.msra.mxu0 %v651
        %697 = vmatpush.bf16.msra.mxu0 %v648
        %698 = vmatpush.bf16.msra.mxu0 %v432
        %699 = vmatpush.bf16.msra.mxu0 %v429
        %700 = vmatpush.bf16.msra.mxu0 %v613
        %701 = vmatpush.bf16.msra.mxu0 %v610
        %702 = vmatmul.bf16.gmra.mxu0 %v678
        %v703 = vpop.f32.mrf.mxu0
        %v704 = vadd.f32 %v664, %v703
        %v705 = vpop.f32.mrf.mxu0
        %v706 = vadd.f32 %v669, %v705
        %707 = vdwg.mxu0
        %708 = vmatpush.bf16.msra.mxu0 0
        %709 = vmatpush.bf16.msra.mxu0 0
        %710 = vmatpush.bf16.msra.mxu0 %v652
        %711 = vmatpush.bf16.msra.mxu0 %v649
        %712 = vmatpush.bf16.msra.mxu0 %v433
        %713 = vmatpush.bf16.msra.mxu0 %v430
        %714 = vmatpush.bf16.msra.mxu0 %v614
        %715 = vmatpush.bf16.msra.mxu0 %v611
        %716 = vmatmul.bf16.gmra.mxu0 %v678
        %v717 = vpop.f32.mrf.mxu0
        %v718 = vadd.f32 %v664, %v717
        %v719 = vpop.f32.mrf.mxu0
        %v720 = vadd.f32 %v669, %v719
        %721 = vdwg.mxu0
        %v722 = vmul.f32 %v690, 0.2
        %v723 = vmul.f32 %v704, 0.2
        %v724 = vmul.f32 %v718, 0.2
        %v725 = vmul.f32 %v692, 0.2
        %v726 = vmul.f32 %v706, 0.2
        %v727 = vmul.f32 %v720, 0.2
        %v728 = vmax.f32 %v690, %v722
        %v729 = vmax.f32 %v704, %v723
        %v730 = vmax.f32 %v718, %v724
        %v731 = vmax.f32 %v692, %v725
        %v732 = vmax.f32 %v706, %v726
        %v733 = vmax.f32 %v720, %v727
        %v734 = vld [vmem:[%s5] sm:$0xf]
        %v735 = vld [vmem:[%s5 + $0x4] sm:$0xf]
        %v736 = vpack.c.bf16 %v729, %v728
        %v737 = vpack.c.bf16 %v730, %v730
        %v738 = vpack.c.bf16 %v732, %v731
        %v739 = vpack.c.bf16 %v733, %v733
        %v744 = vunpack.c.l.b16 %v736
        %v745 = vunpack.c.h.b16 %v736
        %v746 = vunpack.c.l.b16 %v737
        %v747 = vunpack.c.l.b16 %v738
        %v748 = vunpack.c.h.b16 %v738
        %v749 = vunpack.c.l.b16 %v739
        %v750 = vpack.c.b16 %v747, %v744
        %v751 = vpack.c.b16 %v748, %v745
        %v752 = vpack.c.b16 %v749, %v746
        %753 = vrot.lane.b32.xlu0 %v750, 1
        %v754 = vpop.permute.xlu0 %753
        %755 = vrot.lane.b32.xlu0 %v751, 1
        %v756 = vpop.permute.xlu0 %755
        %757 = vrot.lane.b32.xlu0 %v752, 1
        %v758 = vpop.permute.xlu0 %757
        %v759 = vsel %vm446, %v754, %v756
        %v760 = vsel %vm446, %v756, %v758
        %v764 = vsel %vm455, 0, %v754
        %766 = vrot.lane.b32.xlu0 %v750, 127
        %v767 = vpop.permute.xlu0 %766
        %768 = vrot.lane.b32.xlu0 %v751, 127
        %v769 = vpop.permute.xlu0 %768
        %770 = vrot.lane.b32.xlu0 %v752, 127
        %v771 = vpop.permute.xlu0 %770
        %v772 = vsel %vm475, %v767, %v769
        %v773 = vsel %vm475, %v769, %v771
        %v777 = vsel %vm484, %v771, 0
        %779 = vst [vmem:[#allocation1] ss:$9 sm:$0xff] %v396
        %v780 = vld [vmem:[#allocation1] sm:$0xff]
        %v781 = vld [vmem:[#allocation1 + $0x9] sm:$0xff]
        %v782 = vld [vmem:[#allocation1 + $0x12] sm:$0xff]
        %v783 = vpack.i.b16 %v780, %v780
        %v785 = vperm.slane %v783, 0
        %v786 = vpack.i.b16 %v781, %v781
        %v788 = vperm.slane %v786, 0
        %v789 = vpack.i.b16 %v782, %v782
        %v791 = vperm.slane %v789, 0
        %v792 = vunpack.c.l.bf16 %v764
        %v793 = vunpack.c.l.bf16 %v759
        %v794 = vunpack.c.l.bf16 %v760
        %v795 = vunpack.c.h.bf16 %v764
        %v796 = vunpack.c.h.bf16 %v759
        %v797 = vunpack.c.h.bf16 %v760
        %v798 = vunpack.c.l.bf16 %v785
        %v799 = vunpack.c.l.bf16 %v788
        %v800 = vunpack.c.l.bf16 %v791
        %v801 = vmul.f32 %v792, %v798
        %v802 = vmul.f32 %v793, %v799
        %v803 = vmul.f32 %v794, %v800
        %v804 = vmul.f32 %v795, %v798
        %v805 = vmul.f32 %v796, %v799
        %v806 = vmul.f32 %v797, %v800
        %v807 = vpack.c.bf16 %v802, %v801
        %v808 = vpack.c.bf16 %v803, %v803
        %v809 = vpack.c.bf16 %v805, %v804
        %v810 = vpack.c.bf16 %v806, %v806
        %811 = vst [vmem:[#allocation1] ss:$9 sm:$0xff] %v397
        %v812 = vld [vmem:[#allocation1] sm:$0xff]
        %v813 = vld [vmem:[#allocation1 + $0x9] sm:$0xff]
        %v814 = vld [vmem:[#allocation1 + $0x12] sm:$0xff]
        %v815 = vpack.i.b16 %v812, %v812
        %v817 = vperm.slane %v815, 0
        %v818 = vpack.i.b16 %v813, %v813
        %v820 = vperm.slane %v818, 0
        %v821 = vpack.i.b16 %v814, %v814
        %v823 = vperm.slane %v821, 0
        %v824 = vunpack.c.l.bf16 %v772
        %v825 = vunpack.c.l.bf16 %v773
        %v826 = vunpack.c.l.bf16 %v777
        %v827 = vunpack.c.h.bf16 %v772
        %v828 = vunpack.c.h.bf16 %v773
        %v829 = vunpack.c.h.bf16 %v777
        %v830 = vunpack.c.l.bf16 %v817
        %v831 = vunpack.c.l.bf16 %v820
        %v832 = vunpack.c.l.bf16 %v823
        %v833 = vmul.f32 %v824, %v830
        %v834 = vmul.f32 %v825, %v831
        %v835 = vmul.f32 %v826, %v832
        %v836 = vmul.f32 %v827, %v830
        %v837 = vmul.f32 %v828, %v831
        %v838 = vmul.f32 %v829, %v832
        %v839 = vpack.c.bf16 %v834, %v833
        %v840 = vpack.c.bf16 %v835, %v835
        %v841 = vpack.c.bf16 %v837, %v836
        %v842 = vpack.c.bf16 %v838, %v838
        %v847 = vunpack.c.l.b16 %v807
        %v848 = vunpack.c.h.b16 %v807
        %v849 = vunpack.c.l.b16 %v808
        %v850 = vunpack.c.l.b16 %v809
        %v851 = vunpack.c.h.b16 %v809
        %v852 = vunpack.c.l.b16 %v810
        %v853 = vpack.c.b16 %v850, %v847
        %v854 = vpack.c.b16 %v851, %v848
        %v855 = vpack.c.b16 %v852, %v849
        %v866 = vunpack.c.l.b16 %v839
        %v867 = vunpack.c.h.b16 %v839
        %v868 = vunpack.c.l.b16 %v840
        %v869 = vunpack.c.l.b16 %v841
        %v870 = vunpack.c.h.b16 %v841
        %v871 = vunpack.c.l.b16 %v842
        %v872 = vpack.c.b16 %v869, %v866
        %v873 = vpack.c.b16 %v870, %v867
        %v874 = vpack.c.b16 %v871, %v868
        %v878 = vld [vmem:[%s6] sm:$0xff]
        %v879 = vld [vmem:[%s6 + $0x8] sm:$0xff]
        %881 = vset.pattern.permute.xlu0 0
        %882 = vperm.xlu0 %881, %v878
        %v883 = vpop.permute.xlu0 %882
        %886 = vset.pattern.permute.xlu0 0
        %887 = vperm.xlu0 %886, %v879
        %v888 = vpop.permute.xlu0 %887
        %v892 = vunpack.c.l.b16 %v734
        %v893 = vunpack.c.l.b16 %v735
        %v894 = vpack.c.b16 %v893, %v892
        %vm895 = vcmask 392192
        %v897 = vsel %vm895, %v894, 0
        %899 = vmatpush.bf16.msra.mxu0 0
        %900 = vmatpush.bf16.msra.mxu0 0
        %901 = vmatpush.bf16.msra.mxu0 0
        %902 = vmatpush.bf16.msra.mxu0 0
        %903 = vmatpush.bf16.msra.mxu0 0
        %904 = vmatpush.bf16.msra.mxu0 %v872
        %905 = vmatpush.bf16.msra.mxu0 %v750
        %906 = vmatpush.bf16.msra.mxu0 %v853
        %907 = vmatmul.bf16.gmra.mxu0 %v897
        %v908 = vpop.f32.mrf.mxu0
        %v909 = vadd.f32 %v883, %v908
        %v910 = vpop.f32.mrf.mxu0
        %v911 = vadd.f32 %v888, %v910
        %912 = vdwg.mxu0
        %913 = vmatpush.bf16.msra.mxu0 0
        %914 = vmatpush.bf16.msra.mxu0 0
        %915 = vmatpush.bf16.msra.mxu0 0
        %916 = vmatpush.bf16.msra.mxu0 0
        %917 = vmatpush.bf16.msra.mxu0 0
        %918 = vmatpush.bf16.msra.mxu0 %v873
        %919 = vmatpush.bf16.msra.mxu0 %v751
        %920 = vmatpush.bf16.msra.mxu0 %v854
        %921 = vmatmul.bf16.gmra.mxu0 %v897
        %v922 = vpop.f32.mrf.mxu0
        %v923 = vadd.f32 %v883, %v922
        %v924 = vpop.f32.mrf.mxu0
        %v925 = vadd.f32 %v888, %v924
        %926 = vdwg.mxu0
        %927 = vmatpush.bf16.msra.mxu0 0
        %928 = vmatpush.bf16.msra.mxu0 0
        %929 = vmatpush.bf16.msra.mxu0 0
        %930 = vmatpush.bf16.msra.mxu0 0
        %931 = vmatpush.bf16.msra.mxu0 0
        %932 = vmatpush.bf16.msra.mxu0 %v874
        %933 = vmatpush.bf16.msra.mxu0 %v752
        %934 = vmatpush.bf16.msra.mxu0 %v855
        %935 = vmatmul.bf16.gmra.mxu0 %v897
        %v936 = vpop.f32.mrf.mxu0
        %v937 = vadd.f32 %v883, %v936
        %v938 = vpop.f32.mrf.mxu0
        %v939 = vadd.f32 %v888, %v938
        %940 = vdwg.mxu0
        %v941 = vmul.f32 %v909, 0.2
        %v942 = vmul.f32 %v923, 0.2
        %v943 = vmul.f32 %v937, 0.2
        %v944 = vmul.f32 %v911, 0.2
        %v945 = vmul.f32 %v925, 0.2
        %v946 = vmul.f32 %v939, 0.2
        %v947 = vmax.f32 %v909, %v941
        %v948 = vmax.f32 %v923, %v942
        %v949 = vmax.f32 %v937, %v943
        %v950 = vmax.f32 %v911, %v944
        %v951 = vmax.f32 %v925, %v945
        %v952 = vmax.f32 %v939, %v946
        %v953 = vld [vmem:[%s7] sm:$0xff]
        %v954 = vld [vmem:[%s7 + $0x8] sm:$0xff]
        %956 = vset.pattern.permute.xlu0 0
        %957 = vperm.xlu0 %956, %v953
        %v958 = vpop.permute.xlu0 %957
        %961 = vset.pattern.permute.xlu0 0
        %962 = vperm.xlu0 %961, %v954
        %v963 = vpop.permute.xlu0 %962
        %v965 = vmul.f32 %v958, %v947
        %v966 = vmul.f32 %v958, %v948
        %v967 = vmul.f32 %v958, %v949
        %v968 = vmul.f32 %v963, %v950
        %v969 = vmul.f32 %v963, %v951
        %v970 = vmul.f32 %v963, %v952
        %v971 = vadd.f32 %v965, %v968
        %v972 = vrot.slane %v971, 4
        %v973 = vadd.f32 %v971, %v972
        %v974 = vrot.slane %v973, 2
        %v975 = vadd.f32 %v973, %v974
        %v976 = vrot.slane %v975, 1
        %v977 = vadd.f32 %v975, %v976
        %v978 = vadd.f32 %v966, %v969
        %v979 = vrot.slane %v978, 4
        %v980 = vadd.f32 %v978, %v979
        %v981 = vrot.slane %v980, 2
        %v982 = vadd.f32 %v980, %v981
        %v983 = vrot.slane %v982, 1
        %v984 = vadd.f32 %v982, %v983
        %v985 = vadd.f32 %v967, %v970
        %v986 = vrot.slane %v985, 4
        %v987 = vadd.f32 %v985, %v986
        %v988 = vrot.slane %v987, 2
        %v989 = vadd.f32 %v987, %v988
        %v990 = vrot.slane %v989, 1
        %v991 = vadd.f32 %v989, %v990
        %v992 = vld [vmem:[#allocation2] sm:$0x1]
        %994 = vset.pattern.permute.xlu0 0
        %995 = vperm.xlu0 %994, %v992
        %v996 = vpop.permute.xlu0 %995
        %v998 = vperm.slane %v996, 0
        %v999 = vadd.f32 %v977, %v998
        %v1000 = vadd.f32 %v984, %v998
        %v1001 = vadd.f32 %v991, %v998
        %v1002 = vxor.u32 %v999, 2147483648
        %v1003 = vxor.u32 %v1000, 2147483648
        %v1004 = vxor.u32 %v1001, 2147483648
        %v1005 = vmul.f32 %v1002, 1.442695
        %v1006 = vpow.pop %v1005
        %v1007 = vmul.f32 %v1003, 1.442695
        %v1008 = vpow.pop %v1007
        %v1009 = vmul.f32 %v1004, 1.442695
        %v1010 = vpow.pop %v1009
        %v1011 = vadd.f32 %v1006, 1.0
        %v1012 = vadd.f32 %v1008, 1.0
        %v1013 = vadd.f32 %v1010, 1.0
        %v1014 = vrcp.pop %v1011
        %v1015 = vmul.f32 %v1011, %v1014
        %v1016 = vsub.f32 1.0, %v1015
        %v1017 = vmul.f32 %v1014, %v1016
        %v1018 = vadd.f32 %v1014, %v1017
        %vm1019 = vweird.f32 %v1011
        %vm1020 = vweird.f32 %v1014
        %vm1021 = vmor %vm1019, %vm1020
        %v1022 = vsel %vm1021, %v1014, %v1018
        %v1023 = vand.u32 2147483647, %v1011
        %vm1024 = vcmp.eq.f32.partialorder %v1023, 8.507059e+37
        %v1025 = vand.u32 %v1011, 2147483648
        %v1026 = vor.u32 1.1754944e-38, %v1025
        %v1027 = vsel %vm1024, %v1026, %v1022
        %v1028 = vmul.f32 1.0, %v1027
        %v1029 = vrcp.pop %v1012
        %v1030 = vmul.f32 %v1012, %v1029
        %v1031 = vsub.f32 1.0, %v1030
        %v1032 = vmul.f32 %v1029, %v1031
        %v1033 = vadd.f32 %v1029, %v1032
        %vm1034 = vweird.f32 %v1012
        %vm1035 = vweird.f32 %v1029
        %vm1036 = vmor %vm1034, %vm1035
        %v1037 = vsel %vm1036, %v1029, %v1033
        %v1038 = vand.u32 2147483647, %v1012
        %vm1039 = vcmp.eq.f32.partialorder %v1038, 8.507059e+37
        %v1040 = vand.u32 %v1012, 2147483648
        %v1041 = vor.u32 1.1754944e-38, %v1040
        %v1042 = vsel %vm1039, %v1041, %v1037
        %v1043 = vmul.f32 1.0, %v1042
        %v1044 = vrcp.pop %v1013
        %v1045 = vmul.f32 %v1013, %v1044
        %v1046 = vsub.f32 1.0, %v1045
        %v1047 = vmul.f32 %v1044, %v1046
        %v1048 = vadd.f32 %v1044, %v1047
        %vm1049 = vweird.f32 %v1013
        %vm1050 = vweird.f32 %v1044
        %vm1051 = vmor %vm1049, %vm1050
        %v1052 = vsel %vm1051, %v1044, %v1048
        %v1053 = vand.u32 2147483647, %v1013
        %vm1054 = vcmp.eq.f32.partialorder %v1053, 8.507059e+37
        %v1055 = vand.u32 %v1013, 2147483648
        %v1056 = vor.u32 1.1754944e-38, %v1055
        %v1057 = vsel %vm1054, %v1056, %v1052
        %v1058 = vmul.f32 1.0, %v1057
        %v1062 = vrot.slane %v1043, 7
        %v1063 = vrot.slane %v1058, 6
        %vm1064 = vcmask 1040384
        %v1065 = vsel %vm1064, %v1028, %v1062
        %vm1066 = vcmask 1041408
        %v1067 = vsel %vm1066, %v1065, %v1063
        %v1069 = vlaneseq
        %vm1070 = vcmp.ge.s32.totalorder %v1069, 0
        %vm1071 = vcmp.lt.s32.totalorder %v1069, 384
        %vm1072 = vmand %vm1070, %vm1071
        %1073 = vst.msk [vmem:[%s382] sm:$0x7] %vm1072, %v1067
        %s1074 = sand.u32 %s240, 1
        %s1075 = scalar_lea.sflag [#allocation5], %s1074
        %s1076 = sand.u32 %s240, 1
        %s1077 = smul.addr %s1076, 3
        %s1078 = scalar_lea.vmem [#allocation6], %s1077
        // Predicated region
        $region61: #{tpu_custom_call.1} parent=55 // pred_check
          %p1079 = pneg %p250
        $region62: #{tpu_custom_call.1} parent=55 // pred_check_branch
          %1081 = sbr.rel (%p1079) target = $region64
        $region63: #{tpu_custom_call.1} parent=55 // pred_region
          %s1082 = smul.u32 3, %s28
          %1084 = vsyncadd %s1075, 0
          %s1085 = scalar_lea.hbm %s9, %s1082
          %s1087 = sshll.u32 %s1078, 4
          %s1088 = int_to_ptr.vmem [resolvable:$true] %s1087
          %s1089 = sshll.u32 %s1085, 4
          %s1090 = int_to_ptr.hbm [resolvable:$true] %s1089
          %1092 = dma.vmem_to_hbm [thread:$0]  %s1088, 48, %s1090, %s1075
        $region64: #{tpu_custom_call.1} parent=55 // pred_fallthru
          _
      $region56: #{tpu_custom_call.1} parent=5 // pred_fallthru
        _
      %p1093 = scmp.le.s32.totalorder 2, %s23
      // Predicated region
      $region65: #{tpu_custom_call.1} parent=5 // pred_check
        %p1094 = pneg %p1093
      $region66: #{tpu_custom_call.1} parent=5 // pred_check_branch
        %1096 = sbr.rel (%p1094) target = $region68
      $region67: #{tpu_custom_call.1} parent=5 // pred_region
        %s1097 = ssub.s32 %s23, 2
        // Predicated region
        $region69: #{tpu_custom_call.1} parent=67 // pred_check
          %p1098 = pneg %p256
        $region70: #{tpu_custom_call.1} parent=67 // pred_check_branch
          %1100 = sbr.rel (%p1098) target = $region72
        $region71: #{tpu_custom_call.1} parent=67 // pred_region
          %s1101 = sand.u32 %s241, 1
          %s1102 = scalar_lea.sflag [#allocation5], %s1101
          %s1103 = sand.u32 %s241, 1
          %s1104 = smul.addr %s1103, 3
          %s1105 = scalar_lea.vmem [#allocation6], %s1104
          %1107 = dma.done %s1102, 48
        $region72: #{tpu_custom_call.1} parent=67 // pred_fallthru
          _
      $region68: #{tpu_custom_call.1} parent=5 // pred_fallthru
        _
    $region6: #{tpu_custom_call.1} parent=1 // loop_footer
      %s27 = sadd.s32 1, %s23
    $region7: #{tpu_custom_call.1} parent=1 // loop_footer_branch
      %22 = sbr.rel target = $region3
    $region8: #{tpu_custom_call.1} parent=1 // loop_exit
      _
    %1108 = vsyncpa [#allocation4], 1
    %s1109 = scalar_lea.sflag [#allocation4], 1
    %1110 = vsyncpa %s1109, 1
    %1111 = vsyncpa [#allocation5], 1
    %s1112 = scalar_lea.sflag [#allocation5], 1
    %1113 = vsyncpa %s1112, 1

</llo_original>
